<compile_context>
chip_gen: v5e
topology: v5e:2x2
jax: 0.10.0
libtpu: 0.0.40
codegen_flags: <defaults>
</compile_context>

<pallas_src>
import functools
import math

import jax
import jax.numpy as jnp
from jax.experimental import pallas as pl
from jax.experimental.pallas import tpu as pltpu

_LANES = 128
_SUBLANES = 8


def _tversky_sums_kernel(p_ref, t_ref, out_ref, pt_acc, p_acc, t_acc, *,
                         n_rows, block_rows, n_chunks):
    """Accumulate per-sample sums of p*t, p, t into (8, 128) partials.

    p_ref, t_ref : (1, block_rows, 128) input blocks for (sample n, chunk c).
    out_ref      : (1, 3, 8, 128) per-sample partial sums, written once.
    *_acc        : (8, 128) f32 VMEM accumulators (resident per sample).
    """
    c = pl.program_id(1)

    @pl.when(c == 0)
    def _init():
        pt_acc[...] = jnp.zeros_like(pt_acc)
        p_acc[...] = jnp.zeros_like(p_acc)
        t_acc[...] = jnp.zeros_like(t_acc)

    def accumulate(mask_tail_rows):
        p = p_ref[0].astype(jnp.float32)   # (block_rows, 128)
        t = t_ref[0].astype(jnp.float32)
        if mask_tail_rows:
            # Boundary block: rows past n_rows hold unspecified data -> drop.
            row = jax.lax.broadcasted_iota(jnp.int32, (block_rows, _LANES), 0)
            valid = (row + c * block_rows) < n_rows
            p = jnp.where(valid, p, 0.0)
            t = jnp.where(valid, t, 0.0)
        # Free (sublane-splitting) reshape: fold groups of 8 rows so the
        # per-block reduction is vreg-by-vreg VALU adds into an (8, 128)
        # partial — no XLU work, no full-block accumulators.
        p3 = p.reshape(block_rows // _SUBLANES, _SUBLANES, _LANES)
        t3 = t.reshape(block_rows // _SUBLANES, _SUBLANES, _LANES)
        pt_acc[...] += jnp.sum(p3 * t3, axis=0)
        p_acc[...] += jnp.sum(p3, axis=0)
        t_acc[...] += jnp.sum(t3, axis=0)

    ragged = (n_rows % block_rows) != 0   # trace-time constant

    if ragged:
        @pl.when(c < n_chunks - 1)
        def _full_chunk():
            accumulate(False)

        @pl.when(c == n_chunks - 1)
        def _tail_chunk():
            accumulate(True)
    else:
        accumulate(False)

    @pl.when(c == n_chunks - 1)
    def _finalize():
        out_ref[0, 0, :, :] = pt_acc[...]
        out_ref[0, 1, :, :] = p_acc[...]
        out_ref[0, 2, :, :] = t_acc[...]


def tversky_sums(pred_flat, target_flat, *, block_rows_max=4096):
    """pred_flat, target_flat: (N, S). Returns (N, 3) f32 = [sum(p*t), sum(p), sum(t)]."""
    assert block_rows_max % _SUBLANES == 0 and block_rows_max >= _SUBLANES
    N, S = pred_flat.shape

    # Pad S up to a 128-lane multiple (and to at least one (8, 128) tile) so
    # blocks are always (multiple-of-8, 128).  Zeros are neutral for all sums.
    S_pad = pl.cdiv(S, _LANES) * _LANES
    if S_pad // _LANES < _SUBLANES:
        S_pad = _SUBLANES * _LANES
    if S_pad != S:
        # TODO(synk): rare path (S % 128 != 0 or S < 1024) pays one extra HBM
        # copy; the common path is pad-free (free reshape only), with ragged
        # row chunks handled by the in-kernel mask instead of padding.
        pad = ((0, 0), (0, S_pad - S))
        pred_flat = jnp.pad(pred_flat, pad)
        target_flat = jnp.pad(target_flat, pad)

    R = S_pad // _LANES
    pred3 = pred_flat.reshape(N, R, _LANES)      # layout-preserving (free)
    target3 = target_flat.reshape(N, R, _LANES)

    # TR must be a multiple of 8 (sublane constraint + the fold-by-8 reshape);
    # any ragged remainder is masked in-kernel on the last chunk.
    TR = min(block_rows_max, (R // _SUBLANES) * _SUBLANES)
    n_chunks = pl.cdiv(R, TR)

    kernel = functools.partial(
        _tversky_sums_kernel, n_rows=R, block_rows=TR, n_chunks=n_chunks)

    out = pl.pallas_call(
        kernel,
        out_shape=jax.ShapeDtypeStruct((N, 3, _SUBLANES, _LANES), jnp.float32),
        grid_spec=pltpu.PrefetchScalarGridSpec(
            num_scalar_prefetch=0,
            grid=(N, n_chunks),
            in_specs=[
                pl.BlockSpec((1, TR, _LANES), lambda n, c: (n, c, 0)),
                pl.BlockSpec((1, TR, _LANES), lambda n, c: (n, c, 0)),
            ],
            out_specs=pl.BlockSpec((1, 3, _SUBLANES, _LANES),
                                   lambda n, c: (n, 0, 0, 0)),
            scratch_shapes=[
                pltpu.VMEM((_SUBLANES, _LANES), jnp.float32),
                pltpu.VMEM((_SUBLANES, _LANES), jnp.float32),
                pltpu.VMEM((_SUBLANES, _LANES), jnp.float32),
            ],
        ),
        compiler_params=pltpu.CompilerParams(
            # Sample axis parallel (megacore sharding), chunk axis = reduction.
            dimension_semantics=("parallel", "arbitrary"),
        ),
    )(pred3, target3)

    return jnp.sum(out, axis=(-2, -1))   # (N, 3): trivial final 8x128 reduce


def tversky_log_loss_noupbound(pred, target, *, block_rows_max=4096):
    """JAX/Pallas equivalent of TverskyLogLoss_noupbound.forward.

    pred:   (N, 1, D, H, W)
    target: (N, D, H, W)
    returns scalar float32
    """
    pred = jnp.squeeze(pred, axis=1)                        # (N, D, H, W)
    N = pred.shape[0]
    S = math.prod(pred.shape[1:])

    pred_flat = pred.reshape(N, S).astype(jnp.float32)
    target_flat = jnp.asarray(target).reshape(N, S).astype(jnp.float32)

    sums = tversky_sums(pred_flat, target_flat, block_rows_max=block_rows_max)
    tp = sums[:, 0]
    fp = sums[:, 1] - tp     # sum(p) - sum(p*t)  == sum(p * (1 - t))
    fn = sums[:, 2] - tp     # sum(t) - sum(p*t)  == sum((1 - p) * t)

    smooth = 1.0
    dice = tp / (tp + 0.2 * fp + 0.8 * fn + smooth)
    dice_dis = jnp.clip(jnp.mean(1.0 - dice), 0.0, 2.0)
    # After clamping to [0, 2], dice_dis >= 0, so the torch `if dice_dis < 0`
    # branch is dead; the effective computation is always dice_dis + 1.0000001.
    return jnp.log(dice_dis + 1.0000001)


def _reference(pred, target):
    p = jnp.squeeze(pred, axis=1).astype(jnp.float32)
    t = target.astype(jnp.float32)
    tp = jnp.sum(p * t, axis=(1, 2, 3))
    fp = jnp.sum(p * (1.0 - t), axis=(1, 2, 3))
    fn = jnp.sum((1.0 - p) * t, axis=(1, 2, 3))
    dice = tp / (tp + 0.2 * fp + 0.8 * fn + 1.0)
    return jnp.log(jnp.clip(jnp.mean(1.0 - dice), 0.0, 2.0) + 1.0000001)


if __name__ == "__main__":
    key = jax.random.PRNGKey(0)

    cases = [
        # (NCDHW shape, block_rows_max) — small shapes exercising the main paths:
        ((2, 1, 4, 16, 16), 4096),   # S=1024 -> R=8, single chunk per sample
        ((2, 1, 20, 8, 16), 8),      # S=2560 -> R=20, TR=8: 3 chunks, ragged tail
        ((2, 1, 20, 8, 16), 4096),   # S=2560 -> R=20, TR=16: 2 chunks, ragged tail
        ((2, 1, 3, 5, 7), 4096),     # S=105, not a multiple of 128 -> padded path
        ((1, 1, 8, 32, 64), 48),     # S=16384 -> R=128, TR=48: ragged multi-chunk
    ]

    ok = True
    for shape, brm in cases:
        key, k1, k2 = jax.random.split(key, 3)
        pred = jax.random.uniform(k1, shape, dtype=jnp.float32)
        target = (jax.random.uniform(k2, (shape[0],) + shape[2:]) > 0.5).astype(jnp.float32)

        loss = tversky_log_loss_noupbound(pred, target, block_rows_max=brm)
        loss = jax.block_until_ready(loss)

        ref = _reference(pred, target)
        if not jnp.allclose(loss, ref, atol=1e-6, rtol=1e-5):
            ok = False
            print("MISMATCH", shape, brm, float(loss), float(ref))

    if ok:
        print("KERNEL_OK")
</pallas_src>

<mosaic_0001>
module attributes {stable_mosaic.version = 11 : i64} {
  func.func @_tversky_sums_kernel(%arg0: i32, %arg1: i32, %arg2: memref<1x8x128xf32, #tpu.memory_space<vmem>>, %arg3: memref<1x8x128xf32, #tpu.memory_space<vmem>>, %arg4: memref<1x3x8x128xf32, #tpu.memory_space<vmem>>, %arg5: memref<8x128xf32, #tpu.memory_space<vmem>>, %arg6: memref<8x128xf32, #tpu.memory_space<vmem>>, %arg7: memref<8x128xf32, #tpu.memory_space<vmem>>) attributes {dimension_semantics = [#tpu.dimension_semantics<parallel>, #tpu.dimension_semantics<arbitrary>], iteration_bounds = array<i64: 2, 1>, scalar_prefetch = 0 : i64, scratch_operands = 3 : i64, tpu.core_type = #tpu.core_type<tc>, window_params = [{transform_indices = @transform_0, window_bounds = array<i64: 1, 8, 128>}, {transform_indices = @transform_1, window_bounds = array<i64: 1, 8, 128>}, {transform_indices = @transform_2, window_bounds = array<i64: 1, 3, 8, 128>}]} {
    %c0_i32 = arith.constant 0 : i32
    %0 = arith.cmpi eq, %arg1, %c0_i32 : i32
    %1 = arith.extui %0 : i1 to i32
    %c0_i32_0 = arith.constant 0 : i32
    %2 = arith.cmpi ne, %1, %c0_i32_0 : i32
    scf.if %2 {
      %cst_22 = arith.constant 0.000000e+00 : f32
      %25 = vector.broadcast %cst_22 : f32 to vector<8x128xf32>
      %c0_23 = arith.constant 0 : index
      %c0_24 = arith.constant 0 : index
      %26 = vector.load %arg5[%c0_23, %c0_24] : memref<8x128xf32, #tpu.memory_space<vmem>>, vector<8x128xf32>
      tpu.vector_store %arg5[%c0_23, %c0_24], %25 {strides = array<i32>} : memref<8x128xf32, #tpu.memory_space<vmem>>, vector<8x128xf32>,
      %cst_25 = arith.constant 0.000000e+00 : f32
      %27 = vector.broadcast %cst_25 : f32 to vector<8x128xf32>
      %c0_26 = arith.constant 0 : index
      %c0_27 = arith.constant 0 : index
      %28 = vector.load %arg6[%c0_26, %c0_27] : memref<8x128xf32, #tpu.memory_space<vmem>>, vector<8x128xf32>
      tpu.vector_store %arg6[%c0_26, %c0_27], %27 {strides = array<i32>} : memref<8x128xf32, #tpu.memory_space<vmem>>, vector<8x128xf32>,
      %cst_28 = arith.constant 0.000000e+00 : f32
      %29 = vector.broadcast %cst_28 : f32 to vector<8x128xf32>
      %c0_29 = arith.constant 0 : index
      %c0_30 = arith.constant 0 : index
      %30 = vector.load %arg7[%c0_29, %c0_30] : memref<8x128xf32, #tpu.memory_space<vmem>>, vector<8x128xf32>
      tpu.vector_store %arg7[%c0_29, %c0_30], %29 {strides = array<i32>} : memref<8x128xf32, #tpu.memory_space<vmem>>, vector<8x128xf32>,
    } else {
    }
    %c0 = arith.constant 0 : index
    %c0_1 = arith.constant 0 : index
    %c0_2 = arith.constant 0 : index
    %3 = vector.load %arg2[%c0, %c0_1, %c0_2] : memref<1x8x128xf32, #tpu.memory_space<vmem>>, vector<1x8x128xf32>
    %4 = vector.shape_cast %3 : vector<1x8x128xf32> to vector<8x128xf32>
    %c0_3 = arith.constant 0 : index
    %c0_4 = arith.constant 0 : index
    %c0_5 = arith.constant 0 : index
    %5 = vector.load %arg3[%c0_3, %c0_4, %c0_5] : memref<1x8x128xf32, #tpu.memory_space<vmem>>, vector<1x8x128xf32>
    %6 = vector.shape_cast %5 : vector<1x8x128xf32> to vector<8x128xf32>
    %7 = vector.shape_cast %4 : vector<8x128xf32> to vector<1x8x128xf32>
    %8 = vector.shape_cast %6 : vector<8x128xf32> to vector<1x8x128xf32>
    %c0_6 = arith.constant 0 : index
    %c0_7 = arith.constant 0 : index
    %9 = vector.load %arg5[%c0_6, %c0_7] : memref<8x128xf32, #tpu.memory_space<vmem>>, vector<8x128xf32>
    %10 = arith.mulf %7, %8 : vector<1x8x128xf32>
    %cst = arith.constant dense<0.000000e+00> : vector<8x128xf32>
    %11 = vector.multi_reduction <add>, %10, %cst [0] : vector<1x8x128xf32> to vector<8x128xf32>
    %12 = arith.addf %9, %11 : vector<8x128xf32>
    %c0_8 = arith.constant 0 : index
    %c0_9 = arith.constant 0 : index
    %13 = vector.load %arg5[%c0_8, %c0_9] : memref<8x128xf32, #tpu.memory_space<vmem>>, vector<8x128xf32>
    tpu.vector_store %arg5[%c0_8, %c0_9], %12 {strides = array<i32>} : memref<8x128xf32, #tpu.memory_space<vmem>>, vector<8x128xf32>,
    %c0_10 = arith.constant 0 : index
    %c0_11 = arith.constant 0 : index
    %14 = vector.load %arg6[%c0_10, %c0_11] : memref<8x128xf32, #tpu.memory_space<vmem>>, vector<8x128xf32>
    %cst_12 = arith.constant dense<0.000000e+00> : vector<8x128xf32>
    %15 = vector.multi_reduction <add>, %7, %cst_12 [0] : vector<1x8x128xf32> to vector<8x128xf32>
    %16 = arith.addf %14, %15 : vector<8x128xf32>
    %c0_13 = arith.constant 0 : index
    %c0_14 = arith.constant 0 : index
    %17 = vector.load %arg6[%c0_13, %c0_14] : memref<8x128xf32, #tpu.memory_space<vmem>>, vector<8x128xf32>
    tpu.vector_store %arg6[%c0_13, %c0_14], %16 {strides = array<i32>} : memref<8x128xf32, #tpu.memory_space<vmem>>, vector<8x128xf32>,
    %c0_15 = arith.constant 0 : index
    %c0_16 = arith.constant 0 : index
    %18 = vector.load %arg7[%c0_15, %c0_16] : memref<8x128xf32, #tpu.memory_space<vmem>>, vector<8x128xf32>
    %cst_17 = arith.constant dense<0.000000e+00> : vector<8x128xf32>
    %19 = vector.multi_reduction <add>, %8, %cst_17 [0] : vector<1x8x128xf32> to vector<8x128xf32>
    %20 = arith.addf %18, %19 : vector<8x128xf32>
    %c0_18 = arith.constant 0 : index
    %c0_19 = arith.constant 0 : index
    %21 = vector.load %arg7[%c0_18, %c0_19] : memref<8x128xf32, #tpu.memory_space<vmem>>, vector<8x128xf32>
    tpu.vector_store %arg7[%c0_18, %c0_19], %20 {strides = array<i32>} : memref<8x128xf32, #tpu.memory_space<vmem>>, vector<8x128xf32>,
    %c0_i32_20 = arith.constant 0 : i32
    %22 = arith.cmpi eq, %arg1, %c0_i32_20 : i32
    %23 = arith.extui %22 : i1 to i32
    %c0_i32_21 = arith.constant 0 : i32
    %24 = arith.cmpi ne, %23, %c0_i32_21 : i32
    scf.if %24 {
      %c0_22 = arith.constant 0 : index
      %c0_23 = arith.constant 0 : index
      %25 = vector.load %arg5[%c0_22, %c0_23] : memref<8x128xf32, #tpu.memory_space<vmem>>, vector<8x128xf32>
      %c0_24 = arith.constant 0 : index
      %c0_25 = arith.constant 0 : index
      %c0_26 = arith.constant 0 : index
      %c0_27 = arith.constant 0 : index
      %26 = vector.load %arg4[%c0_24, %c0_25, %c0_26, %c0_27] : memref<1x3x8x128xf32, #tpu.memory_space<vmem>>, vector<1x1x8x128xf32>
      %27 = vector.shape_cast %26 : vector<1x1x8x128xf32> to vector<8x128xf32>
      %28 = vector.shape_cast %25 : vector<8x128xf32> to vector<1x1x8x128xf32>
      tpu.vector_store %arg4[%c0_24, %c0_25, %c0_26, %c0_27], %28 {strides = array<i32>} : memref<1x3x8x128xf32, #tpu.memory_space<vmem>>, vector<1x1x8x128xf32>,
      %c0_28 = arith.constant 0 : index
      %c0_29 = arith.constant 0 : index
      %29 = vector.load %arg6[%c0_28, %c0_29] : memref<8x128xf32, #tpu.memory_space<vmem>>, vector<8x128xf32>
      %c0_30 = arith.constant 0 : index
      %c1 = arith.constant 1 : index
      %c0_31 = arith.constant 0 : index
      %c0_32 = arith.constant 0 : index
      %30 = vector.load %arg4[%c0_30, %c1, %c0_31, %c0_32] : memref<1x3x8x128xf32, #tpu.memory_space<vmem>>, vector<1x1x8x128xf32>
      %31 = vector.shape_cast %30 : vector<1x1x8x128xf32> to vector<8x128xf32>
      %32 = vector.shape_cast %29 : vector<8x128xf32> to vector<1x1x8x128xf32>
      tpu.vector_store %arg4[%c0_30, %c1, %c0_31, %c0_32], %32 {strides = array<i32>} : memref<1x3x8x128xf32, #tpu.memory_space<vmem>>, vector<1x1x8x128xf32>,
      %c0_33 = arith.constant 0 : index
      %c0_34 = arith.constant 0 : index
      %33 = vector.load %arg7[%c0_33, %c0_34] : memref<8x128xf32, #tpu.memory_space<vmem>>, vector<8x128xf32>
      %c0_35 = arith.constant 0 : index
      %c2 = arith.constant 2 : index
      %c0_36 = arith.constant 0 : index
      %c0_37 = arith.constant 0 : index
      %34 = vector.load %arg4[%c0_35, %c2, %c0_36, %c0_37] : memref<1x3x8x128xf32, #tpu.memory_space<vmem>>, vector<1x1x8x128xf32>
      %35 = vector.shape_cast %34 : vector<1x1x8x128xf32> to vector<8x128xf32>
      %36 = vector.shape_cast %33 : vector<8x128xf32> to vector<1x1x8x128xf32>
      tpu.vector_store %arg4[%c0_35, %c2, %c0_36, %c0_37], %36 {strides = array<i32>} : memref<1x3x8x128xf32, #tpu.memory_space<vmem>>, vector<1x1x8x128xf32>,
    } else {
    }
    return
  }
  func.func @transform_0(%arg0: i32, %arg1: i32) -> (i32, i32, i32) {
    %c0_i32 = arith.constant 0 : i32
    %c0_i32_0 = arith.constant 0 : i32
    return %arg0, %arg1, %c0_i32 : i32, i32, i32
  }
  func.func @transform_1(%arg0: i32, %arg1: i32) -> (i32, i32, i32) {
    %c0_i32 = arith.constant 0 : i32
    %c0_i32_0 = arith.constant 0 : i32
    return %arg0, %arg1, %c0_i32 : i32, i32, i32
  }
  func.func @transform_2(%arg0: i32, %arg1: i32) -> (i32, i32, i32, i32) {
    %c0_i32 = arith.constant 0 : i32
    %c0_i32_0 = arith.constant 0 : i32
    %c0_i32_1 = arith.constant 0 : i32
    %c0_i32_2 = arith.constant 0 : i32
    return %arg0, %c0_i32, %c0_i32_0, %c0_i32_1 : i32, i32, i32, i32
  }
}

</mosaic_0001>

<llo_original>
// kernel: tpu_custom_call.1
$region0: #{tpu_custom_call.1}
  #allocation0 [shape = 'u32[]', space=smem, size = 0x4, offset = 0x4, fixed_abs, tag = 'smem constant byte address 0x4 - core index']
  #allocation1 [shape = 'u32[72,128]{1,0:T(1,128)}', space=vmem, size = 0x9000, scoped, tag = 'internal scratch']
  #allocation2 [shape = 'f32[8,128]{1,0:T(8,128)}', space=vmem, size = 0x1000, scoped, tag = 'scratch operand']
  #allocation3 [shape = 'f32[8,128]{1,0:T(8,128)}', space=vmem, size = 0x1000, scoped, tag = 'scratch operand']
  #allocation4 [shape = 'f32[8,128]{1,0:T(8,128)}', space=vmem, size = 0x1000, scoped, tag = 'scratch operand']
  %s0 = inlined_call_operand.hbm [shape: f32[2,8,128], index: 0, kind: input, shape index: {}]
  %s1 = inlined_call_operand.hbm [shape: f32[2,8,128], index: 1, kind: input, shape index: {}]
  %s2 = inlined_call_operand.hbm [shape: f32[2,3,8,128], index: 2, kind: output, shape index: {}]
  %s3 = sld [smem:[#allocation0]]
  $region57: #{tpu_custom_call.1} parent=0
    _
  %s5 = ssub.s32 1, %s3
  %s6 = scalar_select 0, %s5, %s3
  $region1: #{tpu_custom_call.1} parent=0
    #allocation5 [shape = 'u8[8192]{0}', space=vmem, size = 0x2000, scoped, tag = 'input window, operand 0']
    #allocation6 [shape = 's32[2]{0}', space=sflag, size = 0x8, scoped, tag = 'scoped memory for tpu_custom_call.1']
    #allocation7 [shape = 's32[2]{0}', space=sflag, size = 0x8, scoped, tag = 'scoped memory for tpu_custom_call.1']
    #allocation8 [shape = 'u8[8192]{0}', space=vmem, size = 0x2000, scoped, tag = 'input window, operand 1']
    #allocation9 [shape = 's32[2]{0}', space=sflag, size = 0x8, scoped, tag = 'scoped memory for tpu_custom_call.1']
    #allocation10 [shape = 'u8[24576]{0}', space=vmem, size = 0x6000, scoped, tag = 'output window, operand 0']
    %7 = vsyncpa [#allocation6], 0
    %s8 = scalar_lea.sflag [#allocation6], 1
    %9 = vsyncpa %s8, 0
    %10 = vsyncpa [#allocation9], 0
    %s11 = scalar_lea.sflag [#allocation9], 1
    %12 = vsyncpa %s11, 0
    %13 = vsyncpa [#allocation7], 0
    %s14 = scalar_lea.sflag [#allocation7], 1
    %15 = vsyncpa %s14, 0
    loop: start=0, step=1, limit=4
    $region2: #{tpu_custom_call.1} parent=1 // loop_pre_header
      _
    $region3: #{tpu_custom_call.1} parent=1 // loop_header
      %s17 = sphi 0, %s21
      %p18 = scmp.ge.s32.totalorder %s17, 4
      %s24 = sphi 0, %s36
      %s25 = sphi 0, %s32
      %s26 = sphi 0, %s24
      %s27 = sphi 0, %s25
      %s28 = sphi 0, %s26
      %s29 = sphi 0, %s27
      %s41 = sphi 0, %s43
      %s44 = sphi 0, %s41
      %s45 = sphi 0, %s44
      %s61 = sphi 0, %s45
      %s69 = sphi 0, %s71
      %s72 = sphi 0, %s69
      %s73 = sphi 0, %s72
      %s89 = sphi 0, %s73
      %s95 = sphi 0, %s97
      %s98 = sphi 0, %s95
      %s99 = sphi 0, %s98
      %s115 = sphi 0, %s99
    $region4: #{tpu_custom_call.1} parent=1 // loop_header_branch
      %20 = sbr.rel (%p18) target = $region8
    $region5: #{tpu_custom_call.1} parent=1 // loop_body
      %s22 = ssub.s32 %s17, 1
      %s23 = ssub.s32 %s17, 2
      %s30 = sadd.s32 1, %s25
      %p31 = scmp.ge.s32.totalorder %s30, 1
      %s32 = scalar_select %p31, 0, %s30
      %s33 = sadd.s32 1, %s24
      %s34 = scalar_select %p31, %s33, %s24
      %p35 = scmp.ge.s32.totalorder %s34, 2
      %s36 = scalar_select %p35, 0, %s34
      %s37 = ssub.s32 %s24, %s36
      %s38 = ssub.s32 %s25, %s32
      %s39 = sor.u32 %s37, %s38
      %p40 = scmp.eq.s32.totalorder %s39, 0
      %s42 = sadd.s32 %s41, 1
      %s43 = scalar_select %p40, %s41, %s42
      %p46 = pneg %p40
      %p47 = scmp.eq.s32.totalorder %s17, 1
      %p48 = por %p46, %p47
      %p49 = scmp.ne.s32.totalorder %s41, %s44
      %p50 = scmp.eq.s32.totalorder %s17, 0
      %p51 = por %p49, %p50
      %p52 = scmp.ne.s32.totalorder %s41, %s44
      %p53 = scmp.eq.s32.totalorder %s22, 1
      %p54 = por %p52, %p53
      %p55 = scmp.ne.s32.totalorder %s44, %s45
      %p56 = scmp.eq.s32.totalorder %s22, 0
      %p57 = por %p55, %p56
      %p58 = scmp.ne.s32.totalorder %s44, %s45
      %p59 = scmp.eq.s32.totalorder %s23, 1
      %p60 = por %p58, %p59
      %p62 = scmp.ne.s32.totalorder %s45, %s61
      %p63 = scmp.eq.s32.totalorder %s23, 0
      %p64 = por %p62, %p63
      %s65 = ssub.s32 %s24, %s36
      %s66 = ssub.s32 %s25, %s32
      %s67 = sor.u32 %s65, %s66
      %p68 = scmp.eq.s32.totalorder %s67, 0
      %s70 = sadd.s32 %s69, 1
      %s71 = scalar_select %p68, %s69, %s70
      %p74 = pneg %p68
      %p75 = scmp.eq.s32.totalorder %s17, 1
      %p76 = por %p74, %p75
      %p77 = scmp.ne.s32.totalorder %s69, %s72
      %p78 = scmp.eq.s32.totalorder %s17, 0
      %p79 = por %p77, %p78
      %p80 = scmp.ne.s32.totalorder %s69, %s72
      %p81 = scmp.eq.s32.totalorder %s22, 1
      %p82 = por %p80, %p81
      %p83 = scmp.ne.s32.totalorder %s72, %s73
      %p84 = scmp.eq.s32.totalorder %s22, 0
      %p85 = por %p83, %p84
      %p86 = scmp.ne.s32.totalorder %s72, %s73
      %p87 = scmp.eq.s32.totalorder %s23, 1
      %p88 = por %p86, %p87
      %p90 = scmp.ne.s32.totalorder %s73, %s89
      %p91 = scmp.eq.s32.totalorder %s23, 0
      %p92 = por %p90, %p91
      %s93 = ssub.s32 %s24, %s36
      %p94 = scmp.eq.s32.totalorder %s93, 0
      %s96 = sadd.s32 %s95, 1
      %s97 = scalar_select %p94, %s95, %s96
      %p100 = pneg %p94
      %p101 = scmp.eq.s32.totalorder %s17, 1
      %p102 = por %p100, %p101
      %p103 = scmp.ne.s32.totalorder %s95, %s98
      %p104 = scmp.eq.s32.totalorder %s17, 0
      %p105 = por %p103, %p104
      %p106 = scmp.ne.s32.totalorder %s95, %s98
      %p107 = scmp.eq.s32.totalorder %s22, 1
      %p108 = por %p106, %p107
      %p109 = scmp.ne.s32.totalorder %s98, %s99
      %p110 = scmp.eq.s32.totalorder %s22, 0
      %p111 = por %p109, %p110
      %p112 = scmp.ne.s32.totalorder %s98, %s99
      %p113 = scmp.eq.s32.totalorder %s23, 1
      %p114 = por %p112, %p113
      %p116 = scmp.ne.s32.totalorder %s99, %s115
      %p117 = scmp.eq.s32.totalorder %s23, 0
      %p118 = por %p116, %p117
      %p119 = scmp.le.s32.totalorder 1, %s17
      %p120 = scmp.lt.s32.totalorder %s17, 3
      %p121 = pnand %p119, %p120
      %p122 = pneg %p121
      // Predicated region
      $region9: #{tpu_custom_call.1} parent=5 // pred_check
        _
      $region10: #{tpu_custom_call.1} parent=5 // pred_check_branch
        %124 = sbr.rel (%p121) target = $region12
      $region11: #{tpu_custom_call.1} parent=5 // pred_region
        %s125 = ssub.s32 %s17, 1
      $region12: #{tpu_custom_call.1} parent=5 // pred_fallthru
        _
      %p126 = scmp.lt.s32.totalorder %s17, 2
      // Predicated region
      $region13: #{tpu_custom_call.1} parent=5 // pred_check
        %p127 = pneg %p126
      $region14: #{tpu_custom_call.1} parent=5 // pred_check_branch
        %129 = sbr.rel (%p127) target = $region16
      $region15: #{tpu_custom_call.1} parent=5 // pred_region
        // Predicated region
        $region17: #{tpu_custom_call.1} parent=15 // pred_check
          %p130 = pneg %p51
        $region18: #{tpu_custom_call.1} parent=15 // pred_check_branch
          %132 = sbr.rel (%p130) target = $region20
        $region19: #{tpu_custom_call.1} parent=15 // pred_region
          %s133 = sand.u32 %s41, 1
          %s134 = scalar_lea.sflag [#allocation6], %s133
          %s135 = sand.u32 %s41, 1
          %s136 = smul.addr %s135, 8
          %s137 = scalar_lea.vmem [#allocation5], %s136
          %139 = vsyncadd %s134, 0
          %s140 = sadd.s32 %s25, %s24
          %s141 = smul.addr %s140, 8
          %s142 = scalar_lea.hbm %s0, %s141
          %s144 = sshll.u32 %s142, 4
          %s145 = int_to_ptr.hbm [resolvable:$true] %s144
          %s146 = sshll.u32 %s137, 4
          %s147 = int_to_ptr.vmem [resolvable:$true] %s146
          %149 = dma.hbm_to_vmem [thread:$0]  %s145, 128, %s147, %s134
        $region20: #{tpu_custom_call.1} parent=15 // pred_fallthru
          _
        // Predicated region
        $region21: #{tpu_custom_call.1} parent=15 // pred_check
          %p150 = pneg %p79
        $region22: #{tpu_custom_call.1} parent=15 // pred_check_branch
          %152 = sbr.rel (%p150) target = $region24
        $region23: #{tpu_custom_call.1} parent=15 // pred_region
          %s153 = sand.u32 %s69, 1
          %s154 = scalar_lea.sflag [#allocation9], %s153
          %s155 = sand.u32 %s69, 1
          %s156 = smul.addr %s155, 8
          %s157 = scalar_lea.vmem [#allocation8], %s156
          %159 = vsyncadd %s154, 0
          %s160 = sadd.s32 %s25, %s24
          %s161 = smul.addr %s160, 8
          %s162 = scalar_lea.hbm %s1, %s161
          %s164 = sshll.u32 %s162, 4
          %s165 = int_to_ptr.hbm [resolvable:$true] %s164
          %s166 = sshll.u32 %s157, 4
          %s167 = int_to_ptr.vmem [resolvable:$true] %s166
          %169 = dma.hbm_to_vmem [thread:$0]  %s165, 128, %s167, %s154
        $region24: #{tpu_custom_call.1} parent=15 // pred_fallthru
          _
      $region16: #{tpu_custom_call.1} parent=5 // pred_fallthru
        _
      %p170 = scmp.le.s32.totalorder 1, %s17
      %p171 = scmp.lt.s32.totalorder %s17, 3
      %p172 = pnand %p170, %p171
      %p173 = pneg %p172
      // Predicated region
      $region25: #{tpu_custom_call.1} parent=5 // pred_check
        _
      $region26: #{tpu_custom_call.1} parent=5 // pred_check_branch
        %175 = sbr.rel (%p172) target = $region28
      $region27: #{tpu_custom_call.1} parent=5 // pred_region
        %s176 = ssub.s32 %s17, 1
        %s177 = sand.u32 %s44, 1
        %s178 = scalar_lea.sflag [#allocation6], %s177
        %s179 = sand.u32 %s44, 1
        %s180 = smul.addr %s179, 8
        %s181 = scalar_lea.vmem [#allocation5], %s180
        // Predicated region
        $region29: #{tpu_custom_call.1} parent=27 // pred_check
          %p182 = pneg %p57
        $region30: #{tpu_custom_call.1} parent=27 // pred_check_branch
          %184 = sbr.rel (%p182) target = $region32
        $region31: #{tpu_custom_call.1} parent=27 // pred_region
          %186 = dma.done %s178, 128
        $region32: #{tpu_custom_call.1} parent=27 // pred_fallthru
          _
        %s187 = sand.u32 %s72, 1
        %s188 = scalar_lea.sflag [#allocation9], %s187
        %s189 = sand.u32 %s72, 1
        %s190 = smul.addr %s189, 8
        %s191 = scalar_lea.vmem [#allocation8], %s190
        // Predicated region
        $region33: #{tpu_custom_call.1} parent=27 // pred_check
          %p192 = pneg %p85
        $region34: #{tpu_custom_call.1} parent=27 // pred_check_branch
          %194 = sbr.rel (%p192) target = $region36
        $region35: #{tpu_custom_call.1} parent=27 // pred_region
          %196 = dma.done %s188, 128
        $region36: #{tpu_custom_call.1} parent=27 // pred_fallthru
          _
        %s197 = sand.u32 %s44, 1
        %s198 = scalar_lea.sflag [#allocation6], %s197
        %s199 = sand.u32 %s44, 1
        %s200 = smul.addr %s199, 8
        %s201 = scalar_lea.vmem [#allocation5], %s200
        %p202 = pneg %p57
        %p203 = pneg %p54
        %s204 = sand.u32 %s72, 1
        %s205 = scalar_lea.sflag [#allocation9], %s204
        %s206 = sand.u32 %s72, 1
        %s207 = smul.addr %s206, 8
        %s208 = scalar_lea.vmem [#allocation8], %s207
        %p209 = pneg %p85
        %p210 = pneg %p82
        %p211 = pneg %p111
        %p212 = pneg %p108
        %s213 = sand.u32 %s98, 1
        %s214 = scalar_lea.sflag [#allocation7], %s213
        %s215 = sand.u32 %s98, 1
        %s216 = smul.addr %s215, 24
        %s217 = scalar_lea.vmem [#allocation10], %s216
        %p218 = scmp.eq.s32.totalorder %s27, 0
        // Predicated region
        $region37: #{tpu_custom_call.1} parent=27 // pred_check
          %p219 = pneg %p218
        $region38: #{tpu_custom_call.1} parent=27 // pred_check_branch
          %221 = sbr.rel (%p219) target = $region40
        $region39: #{tpu_custom_call.1} parent=27 // pred_region
          %222 = vst [vmem:[#allocation2] sm:$0xff] 0.0
          %223 = vst [vmem:[#allocation3] sm:$0xff] 0.0
          %224 = vst [vmem:[#allocation4] sm:$0xff] 0.0
        $region40: #{tpu_custom_call.1} parent=27 // pred_fallthru
          _
        %v225 = vld [vmem:[%s181] sm:$0xff]
        %v226 = vld [vmem:[%s191] sm:$0xff]
        %v227 = vld [vmem:[#allocation2] sm:$0xff]
        %v228 = vmul.f32 %v225, %v226
        %v229 = vadd.f32 %v228, 0.0
        %v230 = vadd.f32 %v227, %v229
        %231 = vst [vmem:[#allocation2] sm:$0xff] %v230
        %v232 = vld [vmem:[#allocation3] sm:$0xff]
        %v233 = vadd.f32 %v225, 0.0
        %v234 = vadd.f32 %v232, %v233
        %235 = vst [vmem:[#allocation3] sm:$0xff] %v234
        %v236 = vld [vmem:[#allocation4] sm:$0xff]
        %v237 = vadd.f32 %v226, 0.0
        %v238 = vadd.f32 %v236, %v237
        %239 = vst [vmem:[#allocation4] sm:$0xff] %v238
        // Predicated region
        $region41: #{tpu_custom_call.1} parent=27 // pred_check
          %p240 = pneg %p218
        $region42: #{tpu_custom_call.1} parent=27 // pred_check_branch
          %242 = sbr.rel (%p240) target = $region44
        $region43: #{tpu_custom_call.1} parent=27 // pred_region
          %v243 = vld [vmem:[#allocation2] sm:$0xff]
          %244 = vst [vmem:[%s217] sm:$0xff] %v243
          %v245 = vld [vmem:[#allocation3] sm:$0xff]
          %s246 = scalar_lea.vmem %s217, 8 [#allocation10]
          %247 = vst [vmem:[%s246] sm:$0xff] %v245
          %v248 = vld [vmem:[#allocation4] sm:$0xff]
          %s249 = scalar_lea.vmem %s217, 16 [#allocation10]
          %250 = vst [vmem:[%s249] sm:$0xff] %v248
        $region44: #{tpu_custom_call.1} parent=27 // pred_fallthru
          _
        %s251 = sand.u32 %s98, 1
        %s252 = scalar_lea.sflag [#allocation7], %s251
        %s253 = sand.u32 %s98, 1
        %s254 = smul.addr %s253, 24
        %s255 = scalar_lea.vmem [#allocation10], %s254
        // Predicated region
        $region45: #{tpu_custom_call.1} parent=27 // pred_check
          %p256 = pneg %p108
        $region46: #{tpu_custom_call.1} parent=27 // pred_check_branch
          %258 = sbr.rel (%p256) target = $region48
        $region47: #{tpu_custom_call.1} parent=27 // pred_region
          %260 = vsyncadd %s252, 0
          %s261 = smul.addr %s26, 3
          %s262 = smul.addr %s261, 8
          %s263 = scalar_lea.hbm %s2, %s262
          %s264 = sshll.u32 %s255, 4
          %s265 = int_to_ptr.vmem [resolvable:$true] %s264
          %s266 = sshll.u32 %s263, 4
          %s267 = int_to_ptr.hbm [resolvable:$true] %s266
          %272 = dma.vmem_to_hbm [thread:$0]  %s265, 384, %s267, %s252, 128, 128, 8
        $region48: #{tpu_custom_call.1} parent=27 // pred_fallthru
          _
      $region28: #{tpu_custom_call.1} parent=5 // pred_fallthru
        _
      %p273 = scmp.le.s32.totalorder 2, %s17
      // Predicated region
      $region49: #{tpu_custom_call.1} parent=5 // pred_check
        %p274 = pneg %p273
      $region50: #{tpu_custom_call.1} parent=5 // pred_check_branch
        %276 = sbr.rel (%p274) target = $region52
      $region51: #{tpu_custom_call.1} parent=5 // pred_region
        %s277 = ssub.s32 %s17, 2
        // Predicated region
        $region53: #{tpu_custom_call.1} parent=51 // pred_check
          %p278 = pneg %p114
        $region54: #{tpu_custom_call.1} parent=51 // pred_check_branch
          %280 = sbr.rel (%p278) target = $region56
        $region55: #{tpu_custom_call.1} parent=51 // pred_region
          %s281 = sand.u32 %s99, 1
          %s282 = scalar_lea.sflag [#allocation7], %s281
          %s283 = sand.u32 %s99, 1
          %s284 = smul.addr %s283, 24
          %s285 = scalar_lea.vmem [#allocation10], %s284
          %287 = dma.done %s282, 384
        $region56: #{tpu_custom_call.1} parent=51 // pred_fallthru
          _
      $region52: #{tpu_custom_call.1} parent=5 // pred_fallthru
        _
    $region6: #{tpu_custom_call.1} parent=1 // loop_footer
      %s21 = sadd.s32 1, %s17
    $region7: #{tpu_custom_call.1} parent=1 // loop_footer_branch
      %16 = sbr.rel target = $region3
    $region8: #{tpu_custom_call.1} parent=1 // loop_exit
      _
    %288 = vsyncpa [#allocation6], 1
    %s289 = scalar_lea.sflag [#allocation6], 1
    %290 = vsyncpa %s289, 1
    %291 = vsyncpa [#allocation9], 1
    %s292 = scalar_lea.sflag [#allocation9], 1
    %293 = vsyncpa %s292, 1
    %294 = vsyncpa [#allocation7], 1
    %s295 = scalar_lea.sflag [#allocation7], 1
    %296 = vsyncpa %s295, 1

</llo_original>
